<compile_context>
chip_gen: v5e
topology: v5e:2x2
jax: 0.10.0
libtpu: 0.0.40
codegen_flags: <defaults>
</compile_context>

<pallas_src>
import functools
import math

import jax
import jax.numpy as jnp
from jax.experimental import pallas as pl
from jax.experimental.pallas import tpu as pltpu

_MASK_NEG = -1e30  # finite stand-in for -inf (see TODO in the kernel)


def _attention_kernel(q_ref, k_ref, v_ref, o_ref, acc_ref, *, scale, mask):
    ki = pl.program_id(2)

    @pl.when(ki == 0)
    def _init():
        acc_ref[...] = jnp.zeros_like(acc_ref)

    # Operands stay in their native dtype; the MXU accumulates in f32.
    # Fold the 1/sqrt(hidden) scale into the small Q tile (H, tq, D).
    q = q_ref[0] * jnp.asarray(scale, dtype=q_ref.dtype)    # (H, tq, D)
    k = k_ref[0]                                            # (H, D, tkv)
    v = v_ref[0]                                            # (H, tkv, D)

    # e = (Q * scale) @ K  -> (H, tq, tkv) in f32.
    e = jnp.einsum("hsd,hdt->hst", q, k,
                   preferred_element_type=jnp.float32)
    tq, tkv = e.shape[1], e.shape[2]

    if mask:
        # torch.triu(..., diagonal=1) == 1  <=>  col > row (global indices).
        # TODO(synk): PyTorch uses -inf here, which combined with the dim=1
        # (head-axis) softmax makes every masked position NaN; we use a large
        # finite negative so the masked path stays usable.
        row0 = pl.program_id(1) * tq
        col0 = ki * tkv
        row = row0 + jax.lax.broadcasted_iota(jnp.int32, (tq, tkv), 0)
        col = col0 + jax.lax.broadcasted_iota(jnp.int32, (tq, tkv), 1)
        e = jnp.where((col > row)[None, :, :], _MASK_NEG, e)

    # nn.Softmax(dim=1): softmax over the HEAD axis (axis 0 here).  All heads
    # are resident in this block, so the softmax is complete per (s, t) entry.
    m = jnp.max(e, axis=0, keepdims=True)
    ex = jnp.exp(e - m)
    denom = jnp.sum(ex, axis=0, keepdims=True)
    # EUP reciprocal + broadcast multiply instead of an (H,tq,tkv) divide.
    # Approx mode only when the output is sub-32-bit (plenty of precision).
    approx = jnp.dtype(o_ref.dtype).itemsize < 4
    a = ex * pl.reciprocal(denom, approx=approx)

    # Partial o = a @ V for this kv tile; accumulate in f32 VMEM scratch.
    acc_ref[...] += jnp.einsum("hst,htd->hsd", a.astype(v.dtype), v,
                               preferred_element_type=jnp.float32)

    @pl.when(ki == pl.num_programs(2) - 1)
    def _finalize():
        o_ref[0] = acc_ref[...].astype(o_ref.dtype)


def _pick_tile(n, target, align):
    """Largest multiple of `align` that divides n and is <= target, else n."""
    if n <= target:
        return n
    t = (target // align) * align
    while t >= align:
        if n % t == 0:
            return t
        t -= align
    return n


def attention(Q, K, V, hidden_size, mask=False, *, tq_target=256, tkv_target=256):
    """Pallas equivalent of Attention.forward(Q, K, V, mask)."""
    B, H, S, D = Q.shape
    T = K.shape[-1]
    assert K.shape == (B, H, D, T)
    assert V.shape == (B, H, T, D)
    assert H * D == hidden_size, "final .view requires H * D == hidden_size"

    # tq only needs sublane (8) alignment (D is the full lane dim of that
    # block); tkv is the lane dim of the K block so it needs 128 alignment
    # (or the full extent).
    tq = _pick_tile(S, tq_target, 8)
    tkv = _pick_tile(T, tkv_target, 128)
    grid = (B, S // tq, T // tkv)

    kernel = functools.partial(_attention_kernel,
                               scale=1.0 / math.sqrt(hidden_size), mask=mask)

    itemsize = jnp.dtype(Q.dtype).itemsize
    cost = pl.CostEstimate(
        flops=4 * B * H * S * T * D,                       # QK and A@V matmuls
        transcendentals=B * H * S * T,                     # softmax exp
        bytes_accessed=itemsize * (Q.size + (K.size + V.size) * (S // tq)
                                   + B * H * S * D))

    o4 = pl.pallas_call(
        kernel,
        out_shape=jax.ShapeDtypeStruct((B, H, S, D), Q.dtype),
        grid=grid,
        in_specs=[
            pl.BlockSpec((1, H, tq, D), lambda b, qi, ki: (b, 0, qi, 0)),
            pl.BlockSpec((1, H, D, tkv), lambda b, qi, ki: (b, 0, 0, ki)),
            pl.BlockSpec((1, H, tkv, D), lambda b, qi, ki: (b, 0, ki, 0)),
        ],
        out_specs=pl.BlockSpec((1, H, tq, D), lambda b, qi, ki: (b, 0, qi, 0)),
        scratch_shapes=[pltpu.VMEM((H, tq, D), jnp.float32)],
        compiler_params=pltpu.CompilerParams(
            dimension_semantics=("parallel", "parallel", "arbitrary"),
            vmem_limit_bytes=48 * 1024 * 1024),
        cost_estimate=cost,
    )(Q, K, V)

    # Matches `o.view(batch, seq, hidden)` — row-major reshape (metadata only).
    return o4.reshape(B, S, hidden_size)


def _reference(Q, K, V, hidden_size, mask=False):
    """Pure-JAX reference reproducing the PyTorch forward (finite mask value)."""
    B, H, S, D = Q.shape
    e = jnp.matmul(Q, K) / math.sqrt(hidden_size)          # (B, H, S, T)
    if mask:
        T = e.shape[-1]
        row = jax.lax.broadcasted_iota(jnp.int32, (S, T), 0)
        col = jax.lax.broadcasted_iota(jnp.int32, (S, T), 1)
        e = jnp.where((col > row)[None, None], _MASK_NEG, e)
    a = jax.nn.softmax(e, axis=1)                          # dim=1 (heads)
    o = jnp.matmul(a, V)                                   # (B, H, S, D)
    return o.reshape(B, S, hidden_size)


if __name__ == "__main__":
    key = jax.random.PRNGKey(0)

    # --- Test 1: small shapes consistent with the module (single tile). ---
    B, H, S, D = 2, 2, 8, 16
    hidden_size = H * D  # 32
    kq, kk, kv = jax.random.split(key, 3)
    Q = jax.random.normal(kq, (B, H, S, D), dtype=jnp.float32)
    K = jax.random.normal(kk, (B, H, D, S), dtype=jnp.float32)
    V = jax.random.normal(kv, (B, H, S, D), dtype=jnp.float32)

    out = attention(Q, K, V, hidden_size, mask=False)
    jax.block_until_ready(out)
    ref = _reference(Q, K, V, hidden_size, mask=False)
    assert out.shape == (B, S, hidden_size)
    assert jnp.allclose(out, ref, atol=2e-5, rtol=2e-5), "mismatch (mask=False)"

    out_m = attention(Q, K, V, hidden_size, mask=True)
    jax.block_until_ready(out_m)
    ref_m = _reference(Q, K, V, hidden_size, mask=True)
    assert jnp.allclose(out_m, ref_m, atol=2e-5, rtol=2e-5), "mismatch (mask=True)"

    # --- Test 2: exercise the tiled grid (2 q-tiles x 2 kv-tiles) and the
    # kv-axis accumulator path, still at small sizes. ---
    B2, H2, S2, D2, T2 = 2, 2, 16, 16, 256
    hidden2 = H2 * D2
    k2q, k2k, k2v = jax.random.split(jax.random.PRNGKey(1), 3)
    Q2 = jax.random.normal(k2q, (B2, H2, S2, D2), dtype=jnp.float32)
    K2 = jax.random.normal(k2k, (B2, H2, D2, T2), dtype=jnp.float32)
    V2 = jax.random.normal(k2v, (B2, H2, T2, D2), dtype=jnp.float32)

    out2 = attention(Q2, K2, V2, hidden2, mask=True, tq_target=8, tkv_target=128)
    jax.block_until_ready(out2)
    ref2 = _reference(Q2, K2, V2, hidden2, mask=True)
    assert out2.shape == (B2, S2, hidden2)
    assert jnp.allclose(out2, ref2, atol=1e-4, rtol=1e-4), "mismatch (tiled)"

    print("KERNEL_OK")
</pallas_src>

<mosaic_0001>
module attributes {stable_mosaic.version = 11 : i64} {
  func.func @_attention_kernel(%arg0: i32, %arg1: i32, %arg2: i32, %arg3: memref<1x2x8x16xf32, #tpu.memory_space<vmem>>, %arg4: memref<1x2x16x8xf32, #tpu.memory_space<vmem>>, %arg5: memref<1x2x8x16xf32, #tpu.memory_space<vmem>>, %arg6: memref<1x2x8x16xf32, #tpu.memory_space<vmem>>, %arg7: memref<2x8x16xf32, #tpu.memory_space<vmem>>) attributes {dimension_semantics = [#tpu.dimension_semantics<parallel>, #tpu.dimension_semantics<parallel>, #tpu.dimension_semantics<arbitrary>], iteration_bounds = array<i64: 2, 1, 1>, scalar_prefetch = 0 : i64, scratch_operands = 1 : i64, tpu.core_type = #tpu.core_type<tc>, window_params = [{transform_indices = @transform_0, window_bounds = array<i64: 1, 2, 8, 16>}, {transform_indices = @transform_1, window_bounds = array<i64: 1, 2, 16, 8>}, {transform_indices = @transform_2, window_bounds = array<i64: 1, 2, 8, 16>}, {transform_indices = @transform_3, window_bounds = array<i64: 1, 2, 8, 16>}]} {
    %c0_i32 = arith.constant 0 : i32
    %0 = arith.cmpi eq, %arg2, %c0_i32 : i32
    %1 = arith.extui %0 : i1 to i32
    %c0_i32_0 = arith.constant 0 : i32
    %2 = arith.cmpi ne, %1, %c0_i32_0 : i32
    scf.if %2 {
      %cst_24 = arith.constant 0.000000e+00 : f32
      %29 = vector.broadcast %cst_24 : f32 to vector<2x8x16xf32>
      %c0_25 = arith.constant 0 : index
      %c0_26 = arith.constant 0 : index
      %c0_27 = arith.constant 0 : index
      %30 = vector.load %arg7[%c0_25, %c0_26, %c0_27] : memref<2x8x16xf32, #tpu.memory_space<vmem>>, vector<2x8x16xf32>
      tpu.vector_store %arg7[%c0_25, %c0_26, %c0_27], %29 {strides = array<i32>} : memref<2x8x16xf32, #tpu.memory_space<vmem>>, vector<2x8x16xf32>,
    } else {
    }
    %c0 = arith.constant 0 : index
    %c0_1 = arith.constant 0 : index
    %c0_2 = arith.constant 0 : index
    %c0_3 = arith.constant 0 : index
    %3 = vector.load %arg3[%c0, %c0_1, %c0_2, %c0_3] : memref<1x2x8x16xf32, #tpu.memory_space<vmem>>, vector<1x2x8x16xf32>
    %4 = vector.shape_cast %3 : vector<1x2x8x16xf32> to vector<2x8x16xf32>
    %cst = arith.constant 0.176776692 : f32
    %5 = vector.broadcast %cst : f32 to vector<2x8x16xf32>
    %6 = arith.mulf %4, %5 : vector<2x8x16xf32>
    %c0_4 = arith.constant 0 : index
    %c0_5 = arith.constant 0 : index
    %c0_6 = arith.constant 0 : index
    %c0_7 = arith.constant 0 : index
    %7 = vector.load %arg4[%c0_4, %c0_5, %c0_6, %c0_7] : memref<1x2x16x8xf32, #tpu.memory_space<vmem>>, vector<1x2x16x8xf32>
    %8 = vector.shape_cast %7 : vector<1x2x16x8xf32> to vector<2x16x8xf32>
    %c0_8 = arith.constant 0 : index
    %c0_9 = arith.constant 0 : index
    %c0_10 = arith.constant 0 : index
    %c0_11 = arith.constant 0 : index
    %9 = vector.load %arg5[%c0_8, %c0_9, %c0_10, %c0_11] : memref<1x2x8x16xf32, #tpu.memory_space<vmem>>, vector<1x2x8x16xf32>
    %10 = vector.shape_cast %9 : vector<1x2x8x16xf32> to vector<2x8x16xf32>
    "tpu.trace_start"() <{level = 10 : i32, message = "hsd,hdt->hst"}> : () -> ()
    %cst_12 = arith.constant dense<0.000000e+00> : vector<2x8x8xf32>
    %11 = tpu.matmul %6, %8, %cst_12 {dimension_numbers = #tpu.dot_dimension_numbers<[2], [1], [1], [2], [0, 0, 0, 1, 1, 2], [0], [0]>} : vector<2x8x16xf32>, vector<2x16x8xf32>, vector<2x8x8xf32> -> vector<2x8x8xf32>
    "tpu.trace_stop"() : () -> ()
    %cst_13 = arith.constant dense<0xFF800000> : vector<8x8xf32>
    %12 = vector.multi_reduction <maximumf>, %11, %cst_13 [0] : vector<2x8x8xf32> to vector<8x8xf32>
    %13 = vector.shape_cast %12 : vector<8x8xf32> to vector<1x8x8xf32>
    %14 = vector.broadcast %13 : vector<1x8x8xf32> to vector<2x8x8xf32>
    %15 = arith.subf %11, %14 : vector<2x8x8xf32>
    %16 = math.exp %15 : vector<2x8x8xf32>
    %cst_14 = arith.constant dense<0.000000e+00> : vector<8x8xf32>
    %17 = vector.multi_reduction <add>, %16, %cst_14 [0] : vector<2x8x8xf32> to vector<8x8xf32>
    %18 = vector.shape_cast %17 : vector<8x8xf32> to vector<1x8x8xf32>
    %19 = tpu.reciprocal %18 : vector<1x8x8xf32> -> vector<1x8x8xf32>
    %20 = vector.broadcast %19 : vector<1x8x8xf32> to vector<2x8x8xf32>
    %21 = arith.mulf %16, %20 : vector<2x8x8xf32>
    %c0_15 = arith.constant 0 : index
    %c0_16 = arith.constant 0 : index
    %c0_17 = arith.constant 0 : index
    %22 = vector.load %arg7[%c0_15, %c0_16, %c0_17] : memref<2x8x16xf32, #tpu.memory_space<vmem>>, vector<2x8x16xf32>
    "tpu.trace_start"() <{level = 10 : i32, message = "hst,htd->hsd"}> : () -> ()
    %cst_18 = arith.constant dense<0.000000e+00> : vector<2x8x16xf32>
    %23 = tpu.matmul %21, %10, %cst_18 {dimension_numbers = #tpu.dot_dimension_numbers<[2], [1], [1], [2], [0, 0, 0, 1, 1, 2], [0], [0]>} : vector<2x8x8xf32>, vector<2x8x16xf32>, vector<2x8x16xf32> -> vector<2x8x16xf32>
    "tpu.trace_stop"() : () -> ()
    %24 = arith.addf %22, %23 : vector<2x8x16xf32>
    %c0_19 = arith.constant 0 : index
    %c0_20 = arith.constant 0 : index
    %c0_21 = arith.constant 0 : index
    %25 = vector.load %arg7[%c0_19, %c0_20, %c0_21] : memref<2x8x16xf32, #tpu.memory_space<vmem>>, vector<2x8x16xf32>
    tpu.vector_store %arg7[%c0_19, %c0_20, %c0_21], %24 {strides = array<i32>} : memref<2x8x16xf32, #tpu.memory_space<vmem>>, vector<2x8x16xf32>,
    %c0_i32_22 = arith.constant 0 : i32
    %26 = arith.cmpi eq, %arg2, %c0_i32_22 : i32
    %27 = arith.extui %26 : i1 to i32
    %c0_i32_23 = arith.constant 0 : i32
    %28 = arith.cmpi ne, %27, %c0_i32_23 : i32
    scf.if %28 {
      %c0_24 = arith.constant 0 : index
      %c0_25 = arith.constant 0 : index
      %c0_26 = arith.constant 0 : index
      %29 = vector.load %arg7[%c0_24, %c0_25, %c0_26] : memref<2x8x16xf32, #tpu.memory_space<vmem>>, vector<2x8x16xf32>
      %c0_27 = arith.constant 0 : index
      %c0_28 = arith.constant 0 : index
      %c0_29 = arith.constant 0 : index
      %c0_30 = arith.constant 0 : index
      %30 = vector.load %arg6[%c0_27, %c0_28, %c0_29, %c0_30] : memref<1x2x8x16xf32, #tpu.memory_space<vmem>>, vector<1x2x8x16xf32>
      %31 = vector.shape_cast %30 : vector<1x2x8x16xf32> to vector<2x8x16xf32>
      %32 = vector.shape_cast %29 : vector<2x8x16xf32> to vector<1x2x8x16xf32>
      tpu.vector_store %arg6[%c0_27, %c0_28, %c0_29, %c0_30], %32 {strides = array<i32>} : memref<1x2x8x16xf32, #tpu.memory_space<vmem>>, vector<1x2x8x16xf32>,
    } else {
    }
    return
  }
  func.func @transform_0(%arg0: i32, %arg1: i32, %arg2: i32) -> (i32, i32, i32, i32) {
    %c0_i32 = arith.constant 0 : i32
    %c0_i32_0 = arith.constant 0 : i32
    %c0_i32_1 = arith.constant 0 : i32
    return %arg0, %c0_i32, %arg1, %c0_i32_0 : i32, i32, i32, i32
  }
  func.func @transform_1(%arg0: i32, %arg1: i32, %arg2: i32) -> (i32, i32, i32, i32) {
    %c0_i32 = arith.constant 0 : i32
    %c0_i32_0 = arith.constant 0 : i32
    %c0_i32_1 = arith.constant 0 : i32
    return %arg0, %c0_i32, %c0_i32_0, %arg2 : i32, i32, i32, i32
  }
  func.func @transform_2(%arg0: i32, %arg1: i32, %arg2: i32) -> (i32, i32, i32, i32) {
    %c0_i32 = arith.constant 0 : i32
    %c0_i32_0 = arith.constant 0 : i32
    %c0_i32_1 = arith.constant 0 : i32
    return %arg0, %c0_i32, %arg2, %c0_i32_0 : i32, i32, i32, i32
  }
  func.func @transform_3(%arg0: i32, %arg1: i32, %arg2: i32) -> (i32, i32, i32, i32) {
    %c0_i32 = arith.constant 0 : i32
    %c0_i32_0 = arith.constant 0 : i32
    %c0_i32_1 = arith.constant 0 : i32
    return %arg0, %c0_i32, %arg1, %c0_i32_0 : i32, i32, i32, i32
  }
}

</mosaic_0001>

<llo_original>
// kernel: tpu_custom_call.1
$region0: #{tpu_custom_call.1}
  #allocation0 [shape = 'u32[]', space=smem, size = 0x4, offset = 0x4, fixed_abs, tag = 'smem constant byte address 0x4 - core index']
  #allocation1 [shape = 'u32[72,128]{1,0:T(1,128)}', space=vmem, size = 0x9000, scoped, tag = 'internal scratch']
  #allocation2 [shape = 'f32[2,8,16]{2,1,0:T(8,128)}', space=vmem, size = 0x2000, scoped, tag = 'scratch operand']
  %s0 = inlined_call_operand.vmem [shape: f32[2,2,8,16], index: 0, kind: input, shape index: {}]
  %s1 = inlined_call_operand.vmem [shape: f32[2,2,16,8], index: 1, kind: input, shape index: {}]
  %s2 = inlined_call_operand.vmem [shape: f32[2,2,8,16], index: 2, kind: input, shape index: {}]
  %s3 = inlined_call_operand.hbm [shape: f32[2,2,8,16], index: 3, kind: output, shape index: {}]
  %s4 = sld [smem:[#allocation0]]
  $region53: #{tpu_custom_call.1} parent=0
    _
  %s6 = ssub.s32 1, %s4
  %s7 = scalar_select 0, %s6, %s4
  $region1: #{tpu_custom_call.1} parent=0
    #allocation3 [shape = 'u8[16384]{0}', space=vmem, size = 0x4000, scoped, tag = 'output window, operand 0']
    #allocation4 [shape = 's32[2]{0}', space=sflag, size = 0x8, scoped, tag = 'scoped memory for tpu_custom_call.1']
    %8 = vsyncpa [#allocation4], 0
    %s9 = scalar_lea.sflag [#allocation4], 1
    %10 = vsyncpa %s9, 0
    loop: start=0, step=1, limit=4
    $region2: #{tpu_custom_call.1} parent=1 // loop_pre_header
      _
    $region3: #{tpu_custom_call.1} parent=1 // loop_header
      %s12 = sphi 0, %s16
      %p13 = scmp.ge.s32.totalorder %s12, 4
      %s19 = sphi 0, %s38
      %s20 = sphi 0, %s34
      %s21 = sphi 0, %s30
      %s22 = sphi 0, %s19
      %s23 = sphi 0, %s20
      %s24 = sphi 0, %s21
      %s25 = sphi 0, %s22
      %s26 = sphi 0, %s23
      %s27 = sphi 0, %s24
      %s43 = sphi 0, %s45
      %s46 = sphi 0, %s43
      %s47 = sphi 0, %s46
      %s63 = sphi 0, %s47
      %s71 = sphi 0, %s73
      %s74 = sphi 0, %s71
      %s75 = sphi 0, %s74
      %s91 = sphi 0, %s75
      %s99 = sphi 0, %s101
      %s102 = sphi 0, %s99
      %s103 = sphi 0, %s102
      %s119 = sphi 0, %s103
      %s127 = sphi 0, %s129
      %s130 = sphi 0, %s127
      %s131 = sphi 0, %s130
      %s147 = sphi 0, %s131
    $region4: #{tpu_custom_call.1} parent=1 // loop_header_branch
      %15 = sbr.rel (%p13) target = $region8
    $region5: #{tpu_custom_call.1} parent=1 // loop_body
      %s17 = ssub.s32 %s12, 1
      %s18 = ssub.s32 %s12, 2
      %s28 = sadd.s32 1, %s21
      %p29 = scmp.ge.s32.totalorder %s28, 1
      %s30 = scalar_select %p29, 0, %s28
      %s31 = sadd.s32 1, %s20
      %s32 = scalar_select %p29, %s31, %s20
      %p33 = scmp.ge.s32.totalorder %s32, 1
      %s34 = scalar_select %p33, 0, %s32
      %s35 = sadd.s32 1, %s19
      %s36 = scalar_select %p33, %s35, %s19
      %p37 = scmp.ge.s32.totalorder %s36, 2
      %s38 = scalar_select %p37, 0, %s36
      %s39 = ssub.s32 %s19, %s38
      %s40 = ssub.s32 %s20, %s34
      %s41 = sor.u32 %s39, %s40
      %p42 = scmp.eq.s32.totalorder %s41, 0
      %s44 = sadd.s32 %s43, 1
      %s45 = scalar_select %p42, %s43, %s44
      %p48 = pneg %p42
      %p49 = scmp.eq.s32.totalorder %s12, 1
      %p50 = por %p48, %p49
      %p51 = scmp.ne.s32.totalorder %s43, %s46
      %p52 = scmp.eq.s32.totalorder %s12, 0
      %p53 = por %p51, %p52
      %p54 = scmp.ne.s32.totalorder %s43, %s46
      %p55 = scmp.eq.s32.totalorder %s17, 1
      %p56 = por %p54, %p55
      %p57 = scmp.ne.s32.totalorder %s46, %s47
      %p58 = scmp.eq.s32.totalorder %s17, 0
      %p59 = por %p57, %p58
      %p60 = scmp.ne.s32.totalorder %s46, %s47
      %p61 = scmp.eq.s32.totalorder %s18, 1
      %p62 = por %p60, %p61
      %p64 = scmp.ne.s32.totalorder %s47, %s63
      %p65 = scmp.eq.s32.totalorder %s18, 0
      %p66 = por %p64, %p65
      %s67 = ssub.s32 %s19, %s38
      %s68 = ssub.s32 %s21, %s30
      %s69 = sor.u32 %s67, %s68
      %p70 = scmp.eq.s32.totalorder %s69, 0
      %s72 = sadd.s32 %s71, 1
      %s73 = scalar_select %p70, %s71, %s72
      %p76 = pneg %p70
      %p77 = scmp.eq.s32.totalorder %s12, 1
      %p78 = por %p76, %p77
      %p79 = scmp.ne.s32.totalorder %s71, %s74
      %p80 = scmp.eq.s32.totalorder %s12, 0
      %p81 = por %p79, %p80
      %p82 = scmp.ne.s32.totalorder %s71, %s74
      %p83 = scmp.eq.s32.totalorder %s17, 1
      %p84 = por %p82, %p83
      %p85 = scmp.ne.s32.totalorder %s74, %s75
      %p86 = scmp.eq.s32.totalorder %s17, 0
      %p87 = por %p85, %p86
      %p88 = scmp.ne.s32.totalorder %s74, %s75
      %p89 = scmp.eq.s32.totalorder %s18, 1
      %p90 = por %p88, %p89
      %p92 = scmp.ne.s32.totalorder %s75, %s91
      %p93 = scmp.eq.s32.totalorder %s18, 0
      %p94 = por %p92, %p93
      %s95 = ssub.s32 %s19, %s38
      %s96 = ssub.s32 %s21, %s30
      %s97 = sor.u32 %s95, %s96
      %p98 = scmp.eq.s32.totalorder %s97, 0
      %s100 = sadd.s32 %s99, 1
      %s101 = scalar_select %p98, %s99, %s100
      %p104 = pneg %p98
      %p105 = scmp.eq.s32.totalorder %s12, 1
      %p106 = por %p104, %p105
      %p107 = scmp.ne.s32.totalorder %s99, %s102
      %p108 = scmp.eq.s32.totalorder %s12, 0
      %p109 = por %p107, %p108
      %p110 = scmp.ne.s32.totalorder %s99, %s102
      %p111 = scmp.eq.s32.totalorder %s17, 1
      %p112 = por %p110, %p111
      %p113 = scmp.ne.s32.totalorder %s102, %s103
      %p114 = scmp.eq.s32.totalorder %s17, 0
      %p115 = por %p113, %p114
      %p116 = scmp.ne.s32.totalorder %s102, %s103
      %p117 = scmp.eq.s32.totalorder %s18, 1
      %p118 = por %p116, %p117
      %p120 = scmp.ne.s32.totalorder %s103, %s119
      %p121 = scmp.eq.s32.totalorder %s18, 0
      %p122 = por %p120, %p121
      %s123 = ssub.s32 %s19, %s38
      %s124 = ssub.s32 %s20, %s34
      %s125 = sor.u32 %s123, %s124
      %p126 = scmp.eq.s32.totalorder %s125, 0
      %s128 = sadd.s32 %s127, 1
      %s129 = scalar_select %p126, %s127, %s128
      %p132 = pneg %p126
      %p133 = scmp.eq.s32.totalorder %s12, 1
      %p134 = por %p132, %p133
      %p135 = scmp.ne.s32.totalorder %s127, %s130
      %p136 = scmp.eq.s32.totalorder %s12, 0
      %p137 = por %p135, %p136
      %p138 = scmp.ne.s32.totalorder %s127, %s130
      %p139 = scmp.eq.s32.totalorder %s17, 1
      %p140 = por %p138, %p139
      %p141 = scmp.ne.s32.totalorder %s130, %s131
      %p142 = scmp.eq.s32.totalorder %s17, 0
      %p143 = por %p141, %p142
      %p144 = scmp.ne.s32.totalorder %s130, %s131
      %p145 = scmp.eq.s32.totalorder %s18, 1
      %p146 = por %p144, %p145
      %p148 = scmp.ne.s32.totalorder %s131, %s147
      %p149 = scmp.eq.s32.totalorder %s18, 0
      %p150 = por %p148, %p149
      %p151 = scmp.le.s32.totalorder 1, %s12
      %p152 = scmp.lt.s32.totalorder %s12, 3
      %p153 = pnand %p151, %p152
      %p154 = pneg %p153
      // Predicated region
      $region9: #{tpu_custom_call.1} parent=5 // pred_check
        _
      $region10: #{tpu_custom_call.1} parent=5 // pred_check_branch
        %156 = sbr.rel (%p153) target = $region12
      $region11: #{tpu_custom_call.1} parent=5 // pred_region
        %s157 = ssub.s32 %s12, 1
      $region12: #{tpu_custom_call.1} parent=5 // pred_fallthru
        _
      %p158 = scmp.lt.s32.totalorder %s12, 2
      // Predicated region
      $region13: #{tpu_custom_call.1} parent=5 // pred_check
        %p159 = pneg %p158
      $region14: #{tpu_custom_call.1} parent=5 // pred_check_branch
        %161 = sbr.rel (%p159) target = $region16
      $region15: #{tpu_custom_call.1} parent=5 // pred_region
        // Predicated region
        $region17: #{tpu_custom_call.1} parent=15 // pred_check
          %p162 = pneg %p53
        $region18: #{tpu_custom_call.1} parent=15 // pred_check_branch
          %164 = sbr.rel (%p162) target = $region20
        $region19: #{tpu_custom_call.1} parent=15 // pred_region
          %p165 = scmp.lt.s32.totalorder %s19, 1
          %s166 = scalar_select %p165, %s19, 1
          %p167 = scmp.lt.s32.totalorder %s20, 0
          %s168 = scalar_select %p167, %s20, 0
          %s169 = smul.addr %s166, 2
          %s170 = sadd.s32 %s168, %s169
          %s171 = smul.addr %s170, 8
          %s172 = scalar_lea.vmem %s0, %s171
        $region20: #{tpu_custom_call.1} parent=15 // pred_fallthru
          _
        // Predicated region
        $region21: #{tpu_custom_call.1} parent=15 // pred_check
          %p173 = pneg %p81
        $region22: #{tpu_custom_call.1} parent=15 // pred_check_branch
          %175 = sbr.rel (%p173) target = $region24
        $region23: #{tpu_custom_call.1} parent=15 // pred_region
          %p176 = scmp.lt.s32.totalorder %s19, 1
          %s177 = scalar_select %p176, %s19, 1
          %p178 = scmp.lt.s32.totalorder %s21, 0
          %s179 = scalar_select %p178, %s21, 0
          %s180 = smul.addr %s177, 4
          %s181 = sadd.s32 %s179, %s180
          %s182 = smul.addr %s181, 8
          %s183 = scalar_lea.vmem %s1, %s182
        $region24: #{tpu_custom_call.1} parent=15 // pred_fallthru
          _
        // Predicated region
        $region25: #{tpu_custom_call.1} parent=15 // pred_check
          %p184 = pneg %p109
        $region26: #{tpu_custom_call.1} parent=15 // pred_check_branch
          %186 = sbr.rel (%p184) target = $region28
        $region27: #{tpu_custom_call.1} parent=15 // pred_region
          %p187 = scmp.lt.s32.totalorder %s19, 1
          %s188 = scalar_select %p187, %s19, 1
          %p189 = scmp.lt.s32.totalorder %s21, 0
          %s190 = scalar_select %p189, %s21, 0
          %s191 = smul.addr %s188, 2
          %s192 = sadd.s32 %s190, %s191
          %s193 = smul.addr %s192, 8
          %s194 = scalar_lea.vmem %s2, %s193
        $region28: #{tpu_custom_call.1} parent=15 // pred_fallthru
          _
      $region16: #{tpu_custom_call.1} parent=5 // pred_fallthru
        _
      %p195 = scmp.le.s32.totalorder 1, %s12
      %p196 = scmp.lt.s32.totalorder %s12, 3
      %p197 = pnand %p195, %p196
      %p198 = pneg %p197
      // Predicated region
      $region29: #{tpu_custom_call.1} parent=5 // pred_check
        _
      $region30: #{tpu_custom_call.1} parent=5 // pred_check_branch
        %200 = sbr.rel (%p197) target = $region32
      $region31: #{tpu_custom_call.1} parent=5 // pred_region
        %s201 = ssub.s32 %s12, 1
        %p202 = scmp.lt.s32.totalorder %s22, 1
        %s203 = scalar_select %p202, %s22, 1
        %p204 = scmp.lt.s32.totalorder %s23, 0
        %s205 = scalar_select %p204, %s23, 0
        %s206 = smul.addr %s203, 2
        %s207 = sadd.s32 %s205, %s206
        %s208 = smul.addr %s207, 8
        %s209 = scalar_lea.vmem %s0, %s208
        %p210 = pneg %p59
        %p211 = pneg %p56
        %p212 = scmp.lt.s32.totalorder %s22, 1
        %s213 = scalar_select %p212, %s22, 1
        %p214 = scmp.lt.s32.totalorder %s24, 0
        %s215 = scalar_select %p214, %s24, 0
        %s216 = smul.addr %s213, 4
        %s217 = sadd.s32 %s215, %s216
        %s218 = smul.addr %s217, 8
        %s219 = scalar_lea.vmem %s1, %s218
        %p220 = pneg %p87
        %p221 = pneg %p84
        %p222 = scmp.lt.s32.totalorder %s22, 1
        %s223 = scalar_select %p222, %s22, 1
        %p224 = scmp.lt.s32.totalorder %s24, 0
        %s225 = scalar_select %p224, %s24, 0
        %s226 = smul.addr %s223, 2
        %s227 = sadd.s32 %s225, %s226
        %s228 = smul.addr %s227, 8
        %s229 = scalar_lea.vmem %s2, %s228
        %p230 = pneg %p115
        %p231 = pneg %p112
        %p232 = pneg %p143
        %p233 = pneg %p140
        %s234 = sand.u32 %s130, 1
        %s235 = scalar_lea.sflag [#allocation4], %s234
        %s236 = sand.u32 %s130, 1
        %s237 = smul.addr %s236, 16
        %s238 = scalar_lea.vmem [#allocation3], %s237
        %p239 = scmp.lt.s32.totalorder %s22, 1
        %s240 = scalar_select %p239, %s22, 1
        %p241 = scmp.lt.s32.totalorder %s23, 0
        %s242 = scalar_select %p241, %s23, 0
        %s243 = smul.addr %s240, 2
        %s244 = sadd.s32 %s242, %s243
        %s245 = smul.addr %s244, 8
        %s246 = scalar_lea.vmem %s0, %s245
        %p247 = scmp.lt.s32.totalorder %s22, 1
        %s248 = scalar_select %p247, %s22, 1
        %p249 = scmp.lt.s32.totalorder %s24, 0
        %s250 = scalar_select %p249, %s24, 0
        %s251 = smul.addr %s248, 4
        %s252 = sadd.s32 %s250, %s251
        %s253 = smul.addr %s252, 8
        %s254 = scalar_lea.vmem %s1, %s253
        %p255 = scmp.lt.s32.totalorder %s22, 1
        %s256 = scalar_select %p255, %s22, 1
        %p257 = scmp.lt.s32.totalorder %s24, 0
        %s258 = scalar_select %p257, %s24, 0
        %s259 = smul.addr %s256, 2
        %s260 = sadd.s32 %s258, %s259
        %s261 = smul.addr %s260, 8
        %s262 = scalar_lea.vmem %s2, %s261
        %p263 = scmp.eq.s32.totalorder %s24, 0
        // Predicated region
        $region33: #{tpu_custom_call.1} parent=31 // pred_check
          %p264 = pneg %p263
        $region34: #{tpu_custom_call.1} parent=31 // pred_check_branch
          %266 = sbr.rel (%p264) target = $region36
        $region35: #{tpu_custom_call.1} parent=31 // pred_region
          %vm267 = vcmask 130048
          %268 = vst.msk [vmem:[#allocation2] sm:$0xff] %vm267, 0.0
          %269 = vst.msk [vmem:[#allocation2 + $0x8] sm:$0xff] %vm267, 0.0
        $region36: #{tpu_custom_call.1} parent=31 // pred_fallthru
          _
        %v270 = vld [vmem:[%s246] sm:$0xff]
        %v271 = vld [vmem:[%s246 + $0x8] sm:$0xff]
        %v272 = vmul.f32 %v270, 0.17677669
        %v273 = vmul.f32 %v271, 0.17677669
        %v274 = vld [vmem:[%s254] sm:$0xff]
        %v275 = vld [vmem:[%s254 + $0x8] sm:$0xff]
        %v276 = vld [vmem:[%s254 + $0x10] sm:$0xff]
        %v277 = vld [vmem:[%s254 + $0x18] sm:$0xff]
        %v278 = vld [vmem:[%s262] sm:$0xff]
        %v279 = vld [vmem:[%s262 + $0x8] sm:$0xff]
        %vm280 = vcmask 130048
        %v282 = vsel %vm280, %v272, 0
        %284 = vmatpush.msra.mxu0 0.0
        %285 = vmatpush.msra.mxu0 0.0
        %286 = vmatpush.msra.mxu0 0.0
        %287 = vmatpush.msra.mxu0 0.0
        %288 = vmatpush.msra.mxu0 0.0
        %289 = vmatpush.msra.mxu0 0.0
        %290 = vmatpush.msra.mxu0 0.0
        %291 = vmatpush.msra.mxu0 0.0
        %292 = vmatpush.msra.mxu0 0.0
        %293 = vmatpush.msra.mxu0 0.0
        %294 = vmatpush.msra.mxu0 0.0
        %295 = vmatpush.msra.mxu0 0.0
        %296 = vmatpush.msra.mxu0 0.0
        %297 = vmatpush.msra.mxu0 0.0
        %298 = vmatpush.msra.mxu0 %v275
        %299 = vmatpush.msra.mxu0 %v274
        %300 = vmatmul.f32.gmra.mxu0 %v282
        %v301 = vpop.f32.mrf.mxu0
        %v302 = vadd.f32 0.0, %v301
        %303 = vdwg.mxu0
        %v305 = vsel %vm280, %v273, 0
        %307 = vmatpush.msra.mxu0 0.0
        %308 = vmatpush.msra.mxu0 0.0
        %309 = vmatpush.msra.mxu0 0.0
        %310 = vmatpush.msra.mxu0 0.0
        %311 = vmatpush.msra.mxu0 0.0
        %312 = vmatpush.msra.mxu0 0.0
        %313 = vmatpush.msra.mxu0 0.0
        %314 = vmatpush.msra.mxu0 0.0
        %315 = vmatpush.msra.mxu0 0.0
        %316 = vmatpush.msra.mxu0 0.0
        %317 = vmatpush.msra.mxu0 0.0
        %318 = vmatpush.msra.mxu0 0.0
        %319 = vmatpush.msra.mxu0 0.0
        %320 = vmatpush.msra.mxu0 0.0
        %321 = vmatpush.msra.mxu0 %v277
        %322 = vmatpush.msra.mxu0 %v276
        %323 = vmatmul.f32.gmra.mxu0 %v305
        %v324 = vpop.f32.mrf.mxu0
        %v325 = vadd.f32 0.0, %v324
        %326 = vdwg.mxu0
        %vm327 = vcmask 64512
        %v328 = vsel %vm327, %v302, -inf
        %v329 = vsel %vm327, %v325, -inf
        %v330 = vmax.f32 %v328, %v329
        %v331 = vsub.f32 %v302, %v330
        %v332 = vsub.f32 %v325, %v330
        %v333 = vmul.f32 %v331, 1.442695
        %v334 = vpow.pop %v333
        %v335 = vmul.f32 %v332, 1.442695
        %v336 = vpow.pop %v335
        %v337 = vsel %vm327, %v334, 0.0
        %v338 = vsel %vm327, %v336, 0.0
        %v339 = vadd.f32 %v337, %v338
        %v340 = vrcp.pop %v339
        %v341 = vmul.f32 %v339, %v340
        %v342 = vsub.f32 1.0, %v341
        %v343 = vmul.f32 %v340, %v342
        %v344 = vadd.f32 %v340, %v343
        %vm345 = vweird.f32 %v339
        %vm346 = vweird.f32 %v340
        %vm347 = vmor %vm345, %vm346
        %v348 = vsel %vm347, %v340, %v344
        %v349 = vand.u32 2147483647, %v339
        %vm350 = vcmp.eq.f32.partialorder %v349, 8.507059e+37
        %v351 = vand.u32 %v339, 2147483648
        %v352 = vor.u32 1.1754944e-38, %v351
        %v353 = vsel %vm350, %v352, %v348
        %v354 = vmul.f32 %v334, %v353
        %v355 = vmul.f32 %v336, %v353
        %v356 = vld [vmem:[#allocation2] sm:$0xff]
        %v357 = vld [vmem:[#allocation2 + $0x8] sm:$0xff]
        %v359 = vsel %vm327, %v354, 0
        %361 = vmatpush.msra.mxu0 0.0
        %362 = vmatpush.msra.mxu0 0.0
        %363 = vmatpush.msra.mxu0 0.0
        %364 = vmatpush.msra.mxu0 0.0
        %365 = vmatpush.msra.mxu0 0.0
        %366 = vmatpush.msra.mxu0 0.0
        %367 = vmatpush.msra.mxu0 0.0
        %368 = vmatpush.msra.mxu0 0.0
        %369 = vmatpush.msra.mxu0 0.0
        %370 = vmatpush.msra.mxu0 0.0
        %371 = vmatpush.msra.mxu0 0.0
        %372 = vmatpush.msra.mxu0 0.0
        %373 = vmatpush.msra.mxu0 0.0
        %374 = vmatpush.msra.mxu0 0.0
        %375 = vmatpush.msra.mxu0 0.0
        %376 = vmatpush.msra.mxu0 %v278
        %377 = vmatmul.f32.gmra.mxu0 %v359
        %v378 = vpop.f32.mrf.mxu0
        %v379 = vadd.f32 0.0, %v378
        %380 = vdwg.mxu0
        %v382 = vsel %vm327, %v355, 0
        %384 = vmatpush.msra.mxu0 0.0
        %385 = vmatpush.msra.mxu0 0.0
        %386 = vmatpush.msra.mxu0 0.0
        %387 = vmatpush.msra.mxu0 0.0
        %388 = vmatpush.msra.mxu0 0.0
        %389 = vmatpush.msra.mxu0 0.0
        %390 = vmatpush.msra.mxu0 0.0
        %391 = vmatpush.msra.mxu0 0.0
        %392 = vmatpush.msra.mxu0 0.0
        %393 = vmatpush.msra.mxu0 0.0
        %394 = vmatpush.msra.mxu0 0.0
        %395 = vmatpush.msra.mxu0 0.0
        %396 = vmatpush.msra.mxu0 0.0
        %397 = vmatpush.msra.mxu0 0.0
        %398 = vmatpush.msra.mxu0 0.0
        %399 = vmatpush.msra.mxu0 %v279
        %400 = vmatmul.f32.gmra.mxu0 %v382
        %v401 = vpop.f32.mrf.mxu0
        %v402 = vadd.f32 0.0, %v401
        %403 = vdwg.mxu0
        %v404 = vadd.f32 %v356, %v379
        %v405 = vadd.f32 %v357, %v402
        %406 = vst.msk [vmem:[#allocation2] sm:$0xff] %vm280, %v404
        %407 = vst.msk [vmem:[#allocation2 + $0x8] sm:$0xff] %vm280, %v405
        // Predicated region
        $region37: #{tpu_custom_call.1} parent=31 // pred_check
          %p408 = pneg %p263
        $region38: #{tpu_custom_call.1} parent=31 // pred_check_branch
          %410 = sbr.rel (%p408) target = $region40
        $region39: #{tpu_custom_call.1} parent=31 // pred_region
          %v411 = vld [vmem:[#allocation2] sm:$0xff]
          %v412 = vld [vmem:[#allocation2 + $0x8] sm:$0xff]
          %413 = vst.msk [vmem:[%s238] sm:$0xff] %vm280, %v411
          %414 = vst.msk [vmem:[%s238 + $0x8] sm:$0xff] %vm280, %v412
        $region40: #{tpu_custom_call.1} parent=31 // pred_fallthru
          _
        %s415 = sand.u32 %s130, 1
        %s416 = scalar_lea.sflag [#allocation4], %s415
        %s417 = sand.u32 %s130, 1
        %s418 = smul.addr %s417, 16
        %s419 = scalar_lea.vmem [#allocation3], %s418
        // Predicated region
        $region41: #{tpu_custom_call.1} parent=31 // pred_check
          %p420 = pneg %p140
        $region42: #{tpu_custom_call.1} parent=31 // pred_check_branch
          %422 = sbr.rel (%p420) target = $region44
        $region43: #{tpu_custom_call.1} parent=31 // pred_region
          %424 = vsyncadd %s416, 0
          %s425 = smul.addr %s22, 2
          %s426 = sadd.s32 %s23, %s425
          %s427 = smul.addr %s426, 8
          %s428 = scalar_lea.hbm %s3, %s427
          %s429 = sshll.u32 %s419, 4
          %s430 = int_to_ptr.vmem [resolvable:$true] %s429
          %s431 = sshll.u32 %s428, 4
          %s432 = int_to_ptr.hbm [resolvable:$true] %s431
          %437 = dma.vmem_to_hbm [thread:$0]  %s430, 256, %s432, %s416, 128, 128, 8
        $region44: #{tpu_custom_call.1} parent=31 // pred_fallthru
          _
      $region32: #{tpu_custom_call.1} parent=5 // pred_fallthru
        _
      %p438 = scmp.le.s32.totalorder 2, %s12
      // Predicated region
      $region45: #{tpu_custom_call.1} parent=5 // pred_check
        %p439 = pneg %p438
      $region46: #{tpu_custom_call.1} parent=5 // pred_check_branch
        %441 = sbr.rel (%p439) target = $region48
      $region47: #{tpu_custom_call.1} parent=5 // pred_region
        %s442 = ssub.s32 %s12, 2
        // Predicated region
        $region49: #{tpu_custom_call.1} parent=47 // pred_check
          %p443 = pneg %p146
        $region50: #{tpu_custom_call.1} parent=47 // pred_check_branch
          %445 = sbr.rel (%p443) target = $region52
        $region51: #{tpu_custom_call.1} parent=47 // pred_region
          %s446 = sand.u32 %s131, 1
          %s447 = scalar_lea.sflag [#allocation4], %s446
          %s448 = sand.u32 %s131, 1
          %s449 = smul.addr %s448, 16
          %s450 = scalar_lea.vmem [#allocation3], %s449
          %452 = dma.done %s447, 256
        $region52: #{tpu_custom_call.1} parent=47 // pred_fallthru
          _
      $region48: #{tpu_custom_call.1} parent=5 // pred_fallthru
        _
    $region6: #{tpu_custom_call.1} parent=1 // loop_footer
      %s16 = sadd.s32 1, %s12
    $region7: #{tpu_custom_call.1} parent=1 // loop_footer_branch
      %11 = sbr.rel target = $region3
    $region8: #{tpu_custom_call.1} parent=1 // loop_exit
      _
    %453 = vsyncpa [#allocation4], 1
    %s454 = scalar_lea.sflag [#allocation4], 1
    %455 = vsyncpa %s454, 1

</llo_original>
